<compile_context>
chip_gen: v5e
topology: v5e:2x2
jax: 0.10.0
libtpu: 0.0.40
codegen_flags: <defaults>
</compile_context>

<pallas_src>
import functools

import jax
import jax.numpy as jnp
from jax.experimental import pallas as pl
from jax.experimental.pallas import tpu as pltpu


def _wml_kernel(out_ref, tgt_ref, part_ref, *, n_rows, tm, mask_tail):
    """One row tile: stable BCE-with-logits, reduced to an (8, C) VPU-only partial sum."""
    i = pl.program_id(0)

    x = out_ref[...].astype(jnp.float32)   # logits tile (tm, C)
    y = tgt_ref[...].astype(jnp.float32)   # targets tile (tm, C)

    # Numerically stable BCE with logits (matches torch.nn.BCEWithLogitsLoss):
    #   loss = max(x, 0) - x*y + log1p(exp(-|x|))
    bce = jnp.maximum(x, 0.0) - x * y + jnp.log1p(jnp.exp(-jnp.abs(x)))
    c = bce.shape[-1]

    def _partial(v):
        # Sublane-group sums are plain VPU vreg adds (no XLU in the hot loop); the
        # single cross-lane/sublane reduce happens once, in the wrapper, over the
        # tiny (G, 8, C) partials array.
        return v.reshape(tm // 8, 8, c).sum(axis=0).reshape(1, 8, c)

    if mask_tail:
        last = pl.num_programs(0) - 1

        @pl.when(i < last)
        def _():
            part_ref[...] = _partial(bce)

        @pl.when(i == last)
        def _():
            rows = jax.lax.broadcasted_iota(jnp.int32, (tm, 1), 0) + i * tm
            # Select (not a multiplicative mask): padded tail rows may hold garbage/NaN.
            part_ref[...] = _partial(jnp.where(rows < n_rows, bce, 0.0))
    else:
        part_ref[...] = _partial(bce)


def _vmem_capacity_bytes():
    try:
        cap = getattr(pltpu.get_tpu_info(), "vmem_capacity_bytes", None)
        if cap:
            return int(cap)
    except Exception:
        pass
    return 64 << 20  # conservative default (v7x-sized)


def _tiling_params(n, c, itemsizes):
    """Per-generation streaming budget -> (row tile tm, vmem_limit_bytes)."""
    if _vmem_capacity_bytes() >= (100 << 20):      # v5e / v6e: 128 MiB physical VMEM
        budget, vmem_limit, cap = 32 << 20, 64 << 20, 4096
    else:                                          # v7x: 64 MiB per TensorCore
        budget, vmem_limit, cap = 16 << 20, 32 << 20, 2048
    per_row = 2 * c * sum(itemsizes)               # 2 pipeline buffers per streamed input
    tm = budget // max(per_row, 1)
    tm = min(tm, cap)
    n_pad = -(-n // 16) * 16                       # no point tiling past the padded batch
    tm = min(tm, n_pad)
    tm = max(16, (tm // 16) * 16)                  # multiple of 16: native bf16 sublane tile
    return tm, vmem_limit


def weighted_multilabel_loss(outputs, targets, weights, *, tm=None):
    """outputs, targets: (N, C); weights: (C,). Returns scalar mean of (BCE * weights)."""
    N, C = outputs.shape
    itemsizes = (jnp.dtype(outputs.dtype).itemsize, jnp.dtype(targets.dtype).itemsize)
    auto_tm, vmem_limit = _tiling_params(N, C, itemsizes)
    if tm is None:
        tm = auto_tm
    assert tm % 8 == 0, "row tile must be a multiple of 8 (sublane)"

    grid = (pl.cdiv(N, tm),)
    mask_tail = (N % tm) != 0

    kernel = functools.partial(_wml_kernel, n_rows=N, tm=tm, mask_tail=mask_tail)

    partials = pl.pallas_call(
        kernel,
        out_shape=jax.ShapeDtypeStruct((grid[0], 8, C), jnp.float32),
        grid_spec=pltpu.PrefetchScalarGridSpec(
            num_scalar_prefetch=0,
            grid=grid,
            in_specs=[
                pl.BlockSpec((tm, C), lambda i: (i, 0)),   # logits row-tile
                pl.BlockSpec((tm, C), lambda i: (i, 0)),   # targets row-tile
            ],
            out_specs=pl.BlockSpec((1, 8, C), lambda i: (i, 0, 0)),  # per-tile partial
        ),
        compiler_params=pltpu.CompilerParams(
            dimension_semantics=("parallel",),   # independent per-tile partials (v7x: 2 TCs)
            vmem_limit_bytes=vmem_limit,
        ),
    )(outputs, targets)
    # TODO(synk): if profiling ever shows exposed DMA at small C, bump input pipelining
    # depth via pipeline_mode=pl.Buffered(3) on the two streamed BlockSpecs.

    # Tiny epilogue: cross-tile/sublane reduce, per-class weights, mean.
    per_class = jnp.sum(partials, axis=(0, 1))                          # (C,) f32
    return jnp.sum(per_class * weights.astype(jnp.float32)) / (N * C)


def _reference(outputs, targets, weights):
    x = outputs.astype(jnp.float32)
    y = targets.astype(jnp.float32)
    bce = jnp.maximum(x, 0.0) - x * y + jnp.log1p(jnp.exp(-jnp.abs(x)))
    return jnp.mean(bce * weights.reshape(1, -1).astype(jnp.float32))


if __name__ == "__main__":
    key = jax.random.PRNGKey(0)
    k1, k2, k3 = jax.random.split(key, 3)

    N, C = 16, 128  # small multilabel problem: 16 samples, 128 classes
    outputs = jax.random.normal(k1, (N, C), dtype=jnp.float32)             # logits
    targets = (jax.random.uniform(k2, (N, C)) > 0.5).astype(jnp.float32)   # 0/1 labels
    weights = 0.5 + jax.random.uniform(k3, (C,), dtype=jnp.float32)        # per-class weights

    loss = weighted_multilabel_loss(outputs, targets, weights)
    jax.block_until_ready(loss)
    ref = _reference(outputs, targets, weights)
    assert jnp.allclose(loss, ref, rtol=1e-5, atol=1e-5), (loss, ref)

    # Ragged batch: exercises the last-tile-only masking path (grid of 2, tail of 5 rows).
    N2 = 21
    o2 = jax.random.normal(k1, (N2, C), dtype=jnp.float32)
    t2 = (jax.random.uniform(k2, (N2, C)) > 0.5).astype(jnp.float32)
    loss2 = weighted_multilabel_loss(o2, t2, weights, tm=16)
    jax.block_until_ready(loss2)
    ref2 = _reference(o2, t2, weights)
    assert jnp.allclose(loss2, ref2, rtol=1e-5, atol=1e-5), (loss2, ref2)

    # bf16 inputs (halved HBM traffic); kernel upcasts on load, accumulation stays f32.
    o3 = outputs.astype(jnp.bfloat16)
    t3 = targets.astype(jnp.bfloat16)
    loss3 = weighted_multilabel_loss(o3, t3, weights)
    jax.block_until_ready(loss3)
    ref3 = _reference(o3, t3, weights)   # reference sees the same bf16-quantized inputs
    assert jnp.allclose(loss3, ref3, rtol=1e-5, atol=1e-5), (loss3, ref3)

    print("KERNEL_OK")
</pallas_src>

<mosaic_0001>
module attributes {stable_mosaic.version = 11 : i64} {
  func.func @_wml_kernel(%arg0: i32, %arg1: memref<16x128xf32, #tpu.memory_space<vmem>>, %arg2: memref<16x128xf32, #tpu.memory_space<vmem>>, %arg3: memref<1x8x128xf32, #tpu.memory_space<vmem>>) attributes {dimension_semantics = [#tpu.dimension_semantics<parallel>], iteration_bounds = array<i64: 1>, scalar_prefetch = 0 : i64, scratch_operands = 0 : i64, tpu.core_type = #tpu.core_type<tc>, window_params = [{transform_indices = @transform_0, window_bounds = array<i64: 16, 128>}, {transform_indices = @transform_1, window_bounds = array<i64: 16, 128>}, {transform_indices = @transform_2, window_bounds = array<i64: 1, 8, 128>}]} {
    %c0 = arith.constant 0 : index
    %c0_0 = arith.constant 0 : index
    %0 = vector.load %arg1[%c0, %c0_0] : memref<16x128xf32, #tpu.memory_space<vmem>>, vector<16x128xf32>
    %c0_1 = arith.constant 0 : index
    %c0_2 = arith.constant 0 : index
    %1 = vector.load %arg2[%c0_1, %c0_2] : memref<16x128xf32, #tpu.memory_space<vmem>>, vector<16x128xf32>
    %cst = arith.constant 0.000000e+00 : f32
    %2 = vector.broadcast %cst : f32 to vector<16x128xf32>
    %3 = arith.maximumf %0, %2 : vector<16x128xf32>
    %4 = arith.mulf %0, %1 : vector<16x128xf32>
    %5 = arith.subf %3, %4 : vector<16x128xf32>
    %6 = math.absf %0 : vector<16x128xf32>
    %cst_3 = arith.constant 0.000000e+00 : f32
    %7 = vector.broadcast %cst_3 : f32 to vector<16x128xf32>
    %8 = arith.subf %7, %6 : vector<16x128xf32>
    %9 = math.exp %8 : vector<16x128xf32>
    %10 = math.log1p %9 : vector<16x128xf32>
    %11 = arith.addf %5, %10 : vector<16x128xf32>
    %12 = vector.shape_cast %11 : vector<16x128xf32> to vector<2x8x128xf32>
    %cst_4 = arith.constant dense<0.000000e+00> : vector<8x128xf32>
    %13 = vector.multi_reduction <add>, %12, %cst_4 [0] : vector<2x8x128xf32> to vector<8x128xf32>
    %14 = vector.shape_cast %13 : vector<8x128xf32> to vector<1x8x128xf32>
    %c0_5 = arith.constant 0 : index
    %c0_6 = arith.constant 0 : index
    %c0_7 = arith.constant 0 : index
    %15 = vector.load %arg3[%c0_5, %c0_6, %c0_7] : memref<1x8x128xf32, #tpu.memory_space<vmem>>, vector<1x8x128xf32>
    tpu.vector_store %arg3[%c0_5, %c0_6, %c0_7], %14 {strides = array<i32>} : memref<1x8x128xf32, #tpu.memory_space<vmem>>, vector<1x8x128xf32>,
    return
  }
  func.func @transform_0(%arg0: i32) -> (i32, i32) {
    %c0_i32 = arith.constant 0 : i32
    %c0_i32_0 = arith.constant 0 : i32
    return %arg0, %c0_i32 : i32, i32
  }
  func.func @transform_1(%arg0: i32) -> (i32, i32) {
    %c0_i32 = arith.constant 0 : i32
    %c0_i32_0 = arith.constant 0 : i32
    return %arg0, %c0_i32 : i32, i32
  }
  func.func @transform_2(%arg0: i32) -> (i32, i32, i32) {
    %c0_i32 = arith.constant 0 : i32
    %c0_i32_0 = arith.constant 0 : i32
    %c0_i32_1 = arith.constant 0 : i32
    return %arg0, %c0_i32, %c0_i32_0 : i32, i32, i32
  }
}

</mosaic_0001>

<llo_original>
// kernel: tpu_custom_call.1
$region0: #{tpu_custom_call.1}
  #allocation0 [shape = 'u32[]', space=smem, size = 0x4, offset = 0x4, fixed_abs, tag = 'smem constant byte address 0x4 - core index']
  #allocation1 [shape = 'u32[72,128]{1,0:T(1,128)}', space=vmem, size = 0x9000, scoped, tag = 'internal scratch']
  %s0 = inlined_call_operand.hbm [shape: f32[16,128], index: 0, kind: input, shape index: {}]
  %s1 = inlined_call_operand.hbm [shape: f32[16,128], index: 1, kind: input, shape index: {}]
  %s2 = inlined_call_operand.hbm [shape: f32[1,8,128], index: 2, kind: output, shape index: {}]
  %s3 = sld [smem:[#allocation0]]
  $region26: #{tpu_custom_call.1} parent=0
    _
  %s5 = ssub.s32 1, %s3
  %s6 = scalar_select 0, %s5, %s3
  $region1: #{tpu_custom_call.1} parent=0
    #allocation2 [shape = 'u8[8192]{0}', space=vmem, size = 0x2000, scoped, tag = 'input window, operand 0, single buffered']
    #allocation3 [shape = 's32[1]{0}', space=sflag, size = 0x4, scoped, tag = 'scoped memory for tpu_custom_call.1']
    #allocation4 [shape = 's32[1]{0}', space=sflag, size = 0x4, scoped, tag = 'scoped memory for tpu_custom_call.1']
    #allocation5 [shape = 'u8[8192]{0}', space=vmem, size = 0x2000, scoped, tag = 'input window, operand 1, single buffered']
    #allocation6 [shape = 's32[1]{0}', space=sflag, size = 0x4, scoped, tag = 'scoped memory for tpu_custom_call.1']
    #allocation7 [shape = 'u8[4096]{0}', space=vmem, size = 0x1000, scoped, tag = 'output window, operand 0, single buffered']
    %7 = vsyncpa [#allocation3], 0
    %8 = vsyncpa [#allocation6], 0
    %9 = vsyncpa [#allocation4], 0
    // Predicated region
    $region2: #{tpu_custom_call.1} parent=1 // pred_check
      _
    $region3: #{tpu_custom_call.1} parent=1 // pred_check_branch
      %11 = sbr.rel (0) target = $region5
    $region4: #{tpu_custom_call.1} parent=1 // pred_region
      %13 = vsyncadd [#allocation3], 0
      %s14 = sshll.u32 %s0, 4
      %s15 = int_to_ptr.hbm [resolvable:$true] %s14
      %s16 = sshll.u32 [#allocation2], 4
      %s17 = int_to_ptr.vmem [resolvable:$true] %s16
      %22 = dma.hbm_to_vmem [thread:$0]  %s15, 256, %s17, [#allocation3], 128, 128, 8
    $region5: #{tpu_custom_call.1} parent=1 // pred_fallthru
      _
    // Predicated region
    $region6: #{tpu_custom_call.1} parent=1 // pred_check
      _
    $region7: #{tpu_custom_call.1} parent=1 // pred_check_branch
      %24 = sbr.rel (0) target = $region9
    $region8: #{tpu_custom_call.1} parent=1 // pred_region
      %26 = vsyncadd [#allocation6], 0
      %s27 = sshll.u32 %s1, 4
      %s28 = int_to_ptr.hbm [resolvable:$true] %s27
      %s29 = sshll.u32 [#allocation5], 4
      %s30 = int_to_ptr.vmem [resolvable:$true] %s29
      %35 = dma.hbm_to_vmem [thread:$0]  %s28, 256, %s30, [#allocation6], 128, 128, 8
    $region9: #{tpu_custom_call.1} parent=1 // pred_fallthru
      _
    // Predicated region
    $region10: #{tpu_custom_call.1} parent=1 // pred_check
      _
    $region11: #{tpu_custom_call.1} parent=1 // pred_check_branch
      %37 = sbr.rel (0) target = $region13
    $region12: #{tpu_custom_call.1} parent=1 // pred_region
      %39 = dma.done [#allocation3], 256
    $region13: #{tpu_custom_call.1} parent=1 // pred_fallthru
      _
    // Predicated region
    $region14: #{tpu_custom_call.1} parent=1 // pred_check
      _
    $region15: #{tpu_custom_call.1} parent=1 // pred_check_branch
      %41 = sbr.rel (0) target = $region17
    $region16: #{tpu_custom_call.1} parent=1 // pred_region
      %43 = dma.done [#allocation6], 256
    $region17: #{tpu_custom_call.1} parent=1 // pred_fallthru
      _
    %v44 = vld [vmem:[#allocation2] sm:$0xff]
    %v45 = vld [vmem:[#allocation2 + $0x8] sm:$0xff]
    %v46 = vld [vmem:[#allocation5] sm:$0xff]
    %v47 = vld [vmem:[#allocation5 + $0x8] sm:$0xff]
    %v48 = vmax.f32 %v44, 0.0
    %v49 = vmax.f32 %v45, 0.0
    %v50 = vmul.f32 %v44, %v46
    %v51 = vmul.f32 %v45, %v47
    %v52 = vsub.f32 %v48, %v50
    %v53 = vsub.f32 %v49, %v51
    %v54 = vand.u32 2147483647, %v44
    %v55 = vand.u32 2147483647, %v45
    %v56 = vsub.f32 0.0, %v54
    %v57 = vsub.f32 0.0, %v55
    %v58 = vmul.f32 %v56, 1.442695
    %v59 = vpow.pop %v58
    %v60 = vmul.f32 %v57, 1.442695
    %v61 = vpow.pop %v60
    %v62 = vadd.f32 %v59, 1.0
    %v63 = vlog2.pop %v62
    %v64 = vmul.f32 %v63, 0.6931472
    %v65 = vmul.f32 -0.5, %v59
    %v66 = vadd.f32 %v65, 1.0
    %v67 = vmul.f32 %v66, %v59
    %v68 = vand.u32 2147483647, %v59
    %vm69 = vcmp.lt.f32.partialorder %v68, 0.0004427343
    %v70 = vsel %vm69, %v67, %v64
    %v71 = vadd.f32 %v61, 1.0
    %v72 = vlog2.pop %v71
    %v73 = vmul.f32 %v72, 0.6931472
    %v74 = vmul.f32 -0.5, %v61
    %v75 = vadd.f32 %v74, 1.0
    %v76 = vmul.f32 %v75, %v61
    %v77 = vand.u32 2147483647, %v61
    %vm78 = vcmp.lt.f32.partialorder %v77, 0.0004427343
    %v79 = vsel %vm78, %v76, %v73
    %v80 = vadd.f32 %v52, %v70
    %v81 = vadd.f32 %v53, %v79
    %v82 = vadd.f32 %v80, %v81
    %83 = vst [vmem:[#allocation7] sm:$0xff] %v82
    // Predicated region
    $region18: #{tpu_custom_call.1} parent=1 // pred_check
      _
    $region19: #{tpu_custom_call.1} parent=1 // pred_check_branch
      %85 = sbr.rel (0) target = $region21
    $region20: #{tpu_custom_call.1} parent=1 // pred_region
      %87 = vsyncadd [#allocation4], 0
      %s89 = sshll.u32 [#allocation7], 4
      %s90 = int_to_ptr.vmem [resolvable:$true] %s89
      %s91 = sshll.u32 %s2, 4
      %s92 = int_to_ptr.hbm [resolvable:$true] %s91
      %94 = dma.vmem_to_hbm [thread:$0]  %s90, 128, %s92, [#allocation4]
    $region21: #{tpu_custom_call.1} parent=1 // pred_fallthru
      _
    // Predicated region
    $region22: #{tpu_custom_call.1} parent=1 // pred_check
      _
    $region23: #{tpu_custom_call.1} parent=1 // pred_check_branch
      %96 = sbr.rel (0) target = $region25
    $region24: #{tpu_custom_call.1} parent=1 // pred_region
      %98 = dma.done [#allocation4], 128
    $region25: #{tpu_custom_call.1} parent=1 // pred_fallthru
      _
    %99 = vsyncpa [#allocation3], 1
    %100 = vsyncpa [#allocation6], 1
    %101 = vsyncpa [#allocation4], 1

</llo_original>
